<compile_context>
chip_gen: v6e
topology: v6e:2x2x1
jax: 0.10.0
libtpu: 0.0.40
codegen_flags: <defaults>
</compile_context>

<pallas_src>
import functools

import jax
import jax.numpy as jnp
from jax.experimental import pallas as pl
from jax.experimental.pallas import tpu as pltpu


_BC = 512          # lane width of a block (multiple of 128 -> unmasked loads/stores)
_MAX_BR = 512      # max sublane rows per block (512x512 f32 = 1 MiB per stream)
_BCE_PAD = -1e4    # BCE(pred=-1e4, target=0) == 0.0 exactly in f32


# ---------------------------------------------------------------------------
# Kernel
# ---------------------------------------------------------------------------
def _fold_to_8x128(elem, br, bc):
    """Sum a (br, bc) f32 tile down to an (8, 128) tile using only VPU adds
    on tile-aligned static slices (no cross-lane/XLU reductions)."""
    col = elem[0:8, :]
    for i in range(1, br // 8):
        col = col + elem[8 * i:8 * (i + 1), :]
    acc = col[:, 0:128]
    for j in range(1, bc // 128):
        acc = acc + col[:, 128 * j:128 * (j + 1)]
    return acc


def _fcos_block_kernel(cnt_ref, isreg_ref, pred_ref, tgt_ref, out_ref, *, br, bc):
    """One grid step: elementwise loss on a homogeneous (br, bc) block,
    folded to an (8,128) partial sum already scaled by 1/segment_numel."""
    b = pl.program_id(0)
    n_f = cnt_ref[b].astype(jnp.float32)      # segment element count (for mean)
    is_reg = isreg_ref[b]                     # 0 -> BCEWithLogits, 1 -> SmoothL1

    x = pred_ref[...].astype(jnp.float32)
    t = tgt_ref[...].astype(jnp.float32)

    @pl.when(is_reg == 0)
    def _bce():
        # Numerically stable BCE-with-logits: max(x,0) - x*t + log1p(exp(-|x|))
        elem = jnp.maximum(x, 0.0) - x * t + jnp.log1p(jnp.exp(-jnp.abs(x)))
        out_ref[...] = _fold_to_8x128(elem, br, bc) / n_f

    @pl.when(is_reg != 0)
    def _smooth_l1():
        d = x - t
        ad = jnp.abs(d)
        elem = jnp.where(ad < 1.0, 0.5 * d * d, ad - 0.5)
        out_ref[...] = _fold_to_8x128(elem, br, bc) / n_f


# ---------------------------------------------------------------------------
# Wrapper glue (plain JAX)
# ---------------------------------------------------------------------------
def _nearest_resize(x, size):
    """Matches F.interpolate(mode='nearest'): src index = floor(i * H_in / H_out)."""
    H, W = x.shape[-2:]
    oh, ow = size
    if (H, W) == (oh, ow):
        return x
    hi = (jnp.arange(oh) * H) // oh
    wi = (jnp.arange(ow) * W) // ow
    return x[:, :, hi, :][:, :, :, wi]


def _round_up(a, b):
    return (a + b - 1) // b * b


def fcos_loss(cls_logits, bbox_reg, centerness, targets):
    """Sum over levels of mean(BCE(cls)) + mean(SmoothL1(reg)) + mean(BCE(ctr))."""
    # Build per-(level, stream) segments: (pred, resized target, is_reg)
    segments = []
    for cls, reg, ctr in zip(cls_logits, bbox_reg, centerness):
        size = cls.shape[-2:]
        segments.append((cls, _nearest_resize(targets["cls"], size), 0))
        segments.append((reg, _nearest_resize(targets["reg"], size), 1))
        segments.append((ctr, _nearest_resize(targets["ctr"], size), 0))

    # Pick the row-block size: as big as possible (up to _MAX_BR) without
    # making blocks far larger than the biggest segment.
    max_rows = max(-(-seg[0].size // _BC) for seg in segments)
    br = min(_MAX_BR, _round_up(max_rows, 8))
    blk_elems = br * _BC

    preds, tgts, cnts, isregs = [], [], [], []
    for p, t, is_reg in segments:
        n = int(p.size)
        nblk = -(-n // blk_elems)
        pad = nblk * blk_elems - n
        pad_pred = 0.0 if is_reg else _BCE_PAD
        pf = jnp.pad(p.reshape(-1).astype(jnp.float32), (0, pad),
                     constant_values=pad_pred)
        tf = jnp.pad(t.reshape(-1).astype(jnp.float32), (0, pad),
                     constant_values=0.0)
        preds.append(pf.reshape(nblk * br, _BC))
        tgts.append(tf.reshape(nblk * br, _BC))
        cnts.append(jnp.full((nblk,), n, jnp.int32))
        isregs.append(jnp.full((nblk,), is_reg, jnp.int32))

    pred = jnp.concatenate(preds, axis=0)
    tgt = jnp.concatenate(tgts, axis=0)
    cnt = jnp.concatenate(cnts, axis=0)
    isreg = jnp.concatenate(isregs, axis=0)
    nb = int(cnt.shape[0])

    partial = pl.pallas_call(
        functools.partial(_fcos_block_kernel, br=br, bc=_BC),
        out_shape=jax.ShapeDtypeStruct((nb * 8, 128), jnp.float32),
        grid_spec=pltpu.PrefetchScalarGridSpec(
            num_scalar_prefetch=2,
            grid=(nb,),
            in_specs=[
                pl.BlockSpec((br, _BC), lambda b, cnt_r, isr_r: (b, 0)),
                pl.BlockSpec((br, _BC), lambda b, cnt_r, isr_r: (b, 0)),
            ],
            out_specs=pl.BlockSpec((8, 128), lambda b, cnt_r, isr_r: (b, 0)),
        ),
        compiler_params=pltpu.CompilerParams(
            dimension_semantics=("parallel",),
            vmem_limit_bytes=32 * 1024 * 1024,
        ),
    )(cnt, isreg, pred, tgt)

    # Tiny final reduction (per-block partials already carry the 1/numel scale).
    return jnp.sum(partial)


# ---------------------------------------------------------------------------
# Pure-JAX reference (for correctness check only)
# ---------------------------------------------------------------------------
def _fcos_loss_ref(cls_logits, bbox_reg, centerness, targets):
    def bce(x, t):
        return jnp.mean(jnp.maximum(x, 0.0) - x * t + jnp.log1p(jnp.exp(-jnp.abs(x))))

    def sl1(x, t):
        d = x - t
        ad = jnp.abs(d)
        return jnp.mean(jnp.where(ad < 1.0, 0.5 * d * d, ad - 0.5))

    total = jnp.float32(0.0)
    for cls, reg, ctr in zip(cls_logits, bbox_reg, centerness):
        size = cls.shape[-2:]
        tcls = _nearest_resize(targets["cls"], size)
        treg = _nearest_resize(targets["reg"], size)
        tctr = _nearest_resize(targets["ctr"], size)
        total = total + bce(cls, tcls) + sl1(reg, treg) + bce(ctr, tctr)
    return total


if __name__ == "__main__":
    # FCOSLoss has no learnable parameters; only inputs are needed.
    key = jax.random.PRNGKey(0)
    ks = jax.random.split(key, 10)

    N, num_classes, H, W = 2, 4, 16, 16

    # Two FPN levels: full resolution and half resolution.
    cls_logits = [
        jax.random.normal(ks[0], (N, num_classes, H, W), jnp.float32),
        jax.random.normal(ks[1], (N, num_classes, H // 2, W // 2), jnp.float32),
    ]
    bbox_reg = [
        jax.random.normal(ks[2], (N, 4, H, W), jnp.float32) * 2.0,
        jax.random.normal(ks[3], (N, 4, H // 2, W // 2), jnp.float32) * 2.0,
    ]
    centerness = [
        jax.random.normal(ks[4], (N, 1, H, W), jnp.float32),
        jax.random.normal(ks[5], (N, 1, H // 2, W // 2), jnp.float32),
    ]
    targets = {
        "cls": jax.random.bernoulli(ks[6], 0.3, (N, num_classes, H, W)).astype(jnp.float32),
        "reg": jnp.abs(jax.random.normal(ks[7], (N, 4, H, W), jnp.float32)) * 2.0,
        "ctr": jax.random.bernoulli(ks[8], 0.5, (N, 1, H, W)).astype(jnp.float32),
    }

    loss = fcos_loss(cls_logits, bbox_reg, centerness, targets)
    loss = jax.block_until_ready(loss)

    ref = jax.block_until_ready(_fcos_loss_ref(cls_logits, bbox_reg, centerness, targets))
    assert jnp.allclose(loss, ref, rtol=1e-4, atol=1e-5), (loss, ref)

    print("KERNEL_OK")
</pallas_src>

<mosaic_0001>
module attributes {stable_mosaic.version = 11 : i64} {
  func.func @_fcos_block_kernel(%arg0: i32, %arg1: memref<6xi32, #tpu.memory_space<smem>>, %arg2: memref<6xi32, #tpu.memory_space<smem>>, %arg3: memref<8x512xf32, #tpu.memory_space<vmem>>, %arg4: memref<8x512xf32, #tpu.memory_space<vmem>>, %arg5: memref<8x128xf32, #tpu.memory_space<vmem>>) attributes {dimension_semantics = [#tpu.dimension_semantics<parallel>], iteration_bounds = array<i64: 6>, scalar_prefetch = 2 : i64, scratch_operands = 0 : i64, tpu.core_type = #tpu.core_type<tc>, window_params = [{transform_indices = @transform_0, window_bounds = array<i64: 8, 512>}, {transform_indices = @transform_1, window_bounds = array<i64: 8, 512>}, {transform_indices = @transform_2, window_bounds = array<i64: 8, 128>}]} {
    %0 = arith.index_cast %arg0 : i32 to index
    %1 = memref.load %arg1[%0] : memref<6xi32, #tpu.memory_space<smem>>
    %2 = arith.sitofp %1 : i32 to f32
    %3 = arith.index_cast %arg0 : i32 to index
    %4 = memref.load %arg2[%3] : memref<6xi32, #tpu.memory_space<smem>>
    %c0 = arith.constant 0 : index
    %c0_0 = arith.constant 0 : index
    %5 = vector.load %arg3[%c0, %c0_0] : memref<8x512xf32, #tpu.memory_space<vmem>>, vector<8x512xf32>
    %c0_1 = arith.constant 0 : index
    %c0_2 = arith.constant 0 : index
    %6 = vector.load %arg4[%c0_1, %c0_2] : memref<8x512xf32, #tpu.memory_space<vmem>>, vector<8x512xf32>
    %c0_i32 = arith.constant 0 : i32
    %7 = arith.cmpi eq, %4, %c0_i32 : i32
    %8 = arith.extui %7 : i1 to i32
    %c0_i32_3 = arith.constant 0 : i32
    %9 = arith.cmpi ne, %8, %c0_i32_3 : i32
    scf.if %9 {
      %cst = arith.constant 0.000000e+00 : f32
      %13 = vector.broadcast %cst : f32 to vector<8x512xf32>
      %14 = arith.maximumf %5, %13 : vector<8x512xf32>
      %15 = arith.mulf %5, %6 : vector<8x512xf32>
      %16 = arith.subf %14, %15 : vector<8x512xf32>
      %17 = math.absf %5 : vector<8x512xf32>
      %cst_6 = arith.constant 0.000000e+00 : f32
      %18 = vector.broadcast %cst_6 : f32 to vector<8x512xf32>
      %19 = arith.subf %18, %17 : vector<8x512xf32>
      %20 = math.exp %19 : vector<8x512xf32>
      %21 = math.log1p %20 : vector<8x512xf32>
      %22 = arith.addf %16, %21 : vector<8x512xf32>
      %23 = vector.extract_strided_slice %22 {offsets = [0, 0], sizes = [8, 128], strides = [1, 1]} : vector<8x512xf32> to vector<8x128xf32>
      %24 = vector.extract_strided_slice %22 {offsets = [0, 128], sizes = [8, 128], strides = [1, 1]} : vector<8x512xf32> to vector<8x128xf32>
      %25 = arith.addf %23, %24 : vector<8x128xf32>
      %26 = vector.extract_strided_slice %22 {offsets = [0, 256], sizes = [8, 128], strides = [1, 1]} : vector<8x512xf32> to vector<8x128xf32>
      %27 = arith.addf %25, %26 : vector<8x128xf32>
      %28 = vector.extract_strided_slice %22 {offsets = [0, 384], sizes = [8, 128], strides = [1, 1]} : vector<8x512xf32> to vector<8x128xf32>
      %29 = arith.addf %27, %28 : vector<8x128xf32>
      %30 = vector.broadcast %2 : f32 to vector<8x128xf32>
      %31 = arith.divf %29, %30 : vector<8x128xf32>
      %c0_7 = arith.constant 0 : index
      %c0_8 = arith.constant 0 : index
      %32 = vector.load %arg5[%c0_7, %c0_8] : memref<8x128xf32, #tpu.memory_space<vmem>>, vector<8x128xf32>
      tpu.vector_store %arg5[%c0_7, %c0_8], %31 {strides = array<i32>} : memref<8x128xf32, #tpu.memory_space<vmem>>, vector<8x128xf32>,
    } else {
    }
    %c0_i32_4 = arith.constant 0 : i32
    %10 = arith.cmpi ne, %4, %c0_i32_4 : i32
    %11 = arith.extui %10 : i1 to i32
    %c0_i32_5 = arith.constant 0 : i32
    %12 = arith.cmpi ne, %11, %c0_i32_5 : i32
    scf.if %12 {
      %13 = arith.subf %5, %6 : vector<8x512xf32>
      %14 = math.absf %13 : vector<8x512xf32>
      %cst = arith.constant 1.000000e+00 : f32
      %15 = vector.broadcast %cst : f32 to vector<8x512xf32>
      %16 = arith.cmpf olt, %14, %15 : vector<8x512xf32>
      %cst_6 = arith.constant 5.000000e-01 : f32
      %17 = vector.broadcast %cst_6 : f32 to vector<8x512xf32>
      %18 = arith.mulf %17, %13 : vector<8x512xf32>
      %19 = arith.mulf %18, %13 : vector<8x512xf32>
      %cst_7 = arith.constant 5.000000e-01 : f32
      %20 = vector.broadcast %cst_7 : f32 to vector<8x512xf32>
      %21 = arith.subf %14, %20 : vector<8x512xf32>
      %22 = arith.select %16, %19, %21 : vector<8x512xi1>, vector<8x512xf32>
      %23 = vector.extract_strided_slice %22 {offsets = [0, 0], sizes = [8, 128], strides = [1, 1]} : vector<8x512xf32> to vector<8x128xf32>
      %24 = vector.extract_strided_slice %22 {offsets = [0, 128], sizes = [8, 128], strides = [1, 1]} : vector<8x512xf32> to vector<8x128xf32>
      %25 = arith.addf %23, %24 : vector<8x128xf32>
      %26 = vector.extract_strided_slice %22 {offsets = [0, 256], sizes = [8, 128], strides = [1, 1]} : vector<8x512xf32> to vector<8x128xf32>
      %27 = arith.addf %25, %26 : vector<8x128xf32>
      %28 = vector.extract_strided_slice %22 {offsets = [0, 384], sizes = [8, 128], strides = [1, 1]} : vector<8x512xf32> to vector<8x128xf32>
      %29 = arith.addf %27, %28 : vector<8x128xf32>
      %30 = vector.broadcast %2 : f32 to vector<8x128xf32>
      %31 = arith.divf %29, %30 : vector<8x128xf32>
      %c0_8 = arith.constant 0 : index
      %c0_9 = arith.constant 0 : index
      %32 = vector.load %arg5[%c0_8, %c0_9] : memref<8x128xf32, #tpu.memory_space<vmem>>, vector<8x128xf32>
      tpu.vector_store %arg5[%c0_8, %c0_9], %31 {strides = array<i32>} : memref<8x128xf32, #tpu.memory_space<vmem>>, vector<8x128xf32>,
    } else {
    }
    return
  }
  func.func @transform_0(%arg0: i32, %arg1: memref<6xi32, #tpu.memory_space<smem>>, %arg2: memref<6xi32, #tpu.memory_space<smem>>) -> (i32, i32) {
    %c0_i32 = arith.constant 0 : i32
    %c0_i32_0 = arith.constant 0 : i32
    return %arg0, %c0_i32 : i32, i32
  }
  func.func @transform_1(%arg0: i32, %arg1: memref<6xi32, #tpu.memory_space<smem>>, %arg2: memref<6xi32, #tpu.memory_space<smem>>) -> (i32, i32) {
    %c0_i32 = arith.constant 0 : i32
    %c0_i32_0 = arith.constant 0 : i32
    return %arg0, %c0_i32 : i32, i32
  }
  func.func @transform_2(%arg0: i32, %arg1: memref<6xi32, #tpu.memory_space<smem>>, %arg2: memref<6xi32, #tpu.memory_space<smem>>) -> (i32, i32) {
    %c0_i32 = arith.constant 0 : i32
    %c0_i32_0 = arith.constant 0 : i32
    return %arg0, %c0_i32 : i32, i32
  }
}

</mosaic_0001>

<llo_original>
// kernel: tpu_custom_call.1
$region0: #{tpu_custom_call.1}
  #allocation0 [shape = 'u32[]', space=smem, size = 0x4, offset = 0x4, fixed_abs, tag = 'smem constant byte address 0x4 - core index']
  #allocation1 [shape = 'u32[144,128]{1,0:T(1,128)}', space=vmem, size = 0x12000, scoped, tag = 'internal scratch']
  #allocation2 [shape = 's32[1]{0}', space=sflag, size = 0x4, scoped, tag = 'scoped memory for tpu_custom_call.1']
  #allocation3 [shape = 'u8[512]{0}', space=smem, size = 0x200, scoped, tag = 'prefetched SMEM operand 0']
  #allocation4 [shape = 'u8[512]{0}', space=smem, size = 0x200, scoped, tag = 'prefetched SMEM operand 1']
  %s0 = inlined_call_operand.hbm [shape: s32[6], index: 0, kind: input, shape index: {}]
  %s1 = inlined_call_operand.vmem [shape: s32[6], index: 1, kind: input, shape index: {}]
  %s2 = inlined_call_operand.hbm [shape: f32[48,512], index: 2, kind: input, shape index: {}]
  %s3 = inlined_call_operand.hbm [shape: f32[48,512], index: 3, kind: input, shape index: {}]
  %s4 = inlined_call_operand.hbm [shape: f32[48,128], index: 4, kind: output, shape index: {}]
  %s5 = sld [smem:[#allocation0]]
  $region57: #{tpu_custom_call.1} parent=0
    _
  %s7 = ssub.s32 1, %s5
  %s8 = scalar_select 0, %s7, %s5
  %10 = dma.hbm_to_smem %s0, 16, [#allocation3], [#allocation2]
  %s11 = sshll.u32 %s1, 4
  %s12 = int_to_ptr.vmem [resolvable:$true] %s11
  %14 = dma.vmem_to_smem %s12, 16, [#allocation4], [#allocation2]
  %15 = dma.done [#allocation2], 32
  %16 = sfence
  $region1: #{tpu_custom_call.1} parent=0
    #allocation5 [shape = 'u8[32768]{0}', space=vmem, size = 0x8000, scoped, tag = 'input window, operand 2']
    #allocation6 [shape = 's32[2]{0}', space=sflag, size = 0x8, scoped, tag = 'scoped memory for tpu_custom_call.1']
    #allocation7 [shape = 's32[2]{0}', space=sflag, size = 0x8, scoped, tag = 'scoped memory for tpu_custom_call.1']
    #allocation8 [shape = 'u8[32768]{0}', space=vmem, size = 0x8000, scoped, tag = 'input window, operand 3']
    #allocation9 [shape = 's32[2]{0}', space=sflag, size = 0x8, scoped, tag = 'scoped memory for tpu_custom_call.1']
    #allocation10 [shape = 'u8[8192]{0}', space=vmem, size = 0x2000, scoped, tag = 'output window, operand 0']
    %17 = vsyncpa [#allocation6], 0
    %s18 = scalar_lea.sflag [#allocation6], 1
    %19 = vsyncpa %s18, 0
    %20 = vsyncpa [#allocation9], 0
    %s21 = scalar_lea.sflag [#allocation9], 1
    %22 = vsyncpa %s21, 0
    %23 = vsyncpa [#allocation7], 0
    %s24 = scalar_lea.sflag [#allocation7], 1
    %25 = vsyncpa %s24, 0
    loop: start=0, step=1, limit=8
    $region2: #{tpu_custom_call.1} parent=1 // loop_pre_header
      _
    $region3: #{tpu_custom_call.1} parent=1 // loop_header
      %s27 = sphi 0, %s31
      %p28 = scmp.ge.s32.totalorder %s27, 8
      %s37 = sphi 0, %s39
      %s40 = sphi 0, %s37
      %s41 = sphi 0, %s40
      %s57 = sphi 0, %s41
      %s63 = sphi 0, %s65
      %s66 = sphi 0, %s63
      %s67 = sphi 0, %s66
      %s83 = sphi 0, %s67
      %s89 = sphi 0, %s91
      %s92 = sphi 0, %s89
      %s93 = sphi 0, %s92
      %s109 = sphi 0, %s93
    $region4: #{tpu_custom_call.1} parent=1 // loop_header_branch
      %30 = sbr.rel (%p28) target = $region8
    $region5: #{tpu_custom_call.1} parent=1 // loop_body
      %s32 = ssub.s32 %s27, 1
      %s33 = ssub.s32 %s27, 2
      %s34 = sadd.s32 %s27, 1
      %s35 = ssub.s32 %s27, %s34
      %p36 = scmp.eq.s32.totalorder %s35, 0
      %s38 = sadd.s32 %s37, 1
      %s39 = scalar_select %p36, %s37, %s38
      %p42 = pneg %p36
      %p43 = scmp.eq.s32.totalorder %s27, 5
      %p44 = por %p42, %p43
      %p45 = scmp.ne.s32.totalorder %s37, %s40
      %p46 = scmp.eq.s32.totalorder %s27, 0
      %p47 = por %p45, %p46
      %p48 = scmp.ne.s32.totalorder %s37, %s40
      %p49 = scmp.eq.s32.totalorder %s32, 5
      %p50 = por %p48, %p49
      %p51 = scmp.ne.s32.totalorder %s40, %s41
      %p52 = scmp.eq.s32.totalorder %s32, 0
      %p53 = por %p51, %p52
      %p54 = scmp.ne.s32.totalorder %s40, %s41
      %p55 = scmp.eq.s32.totalorder %s33, 5
      %p56 = por %p54, %p55
      %p58 = scmp.ne.s32.totalorder %s41, %s57
      %p59 = scmp.eq.s32.totalorder %s33, 0
      %p60 = por %p58, %p59
      %s61 = ssub.s32 %s27, %s34
      %p62 = scmp.eq.s32.totalorder %s61, 0
      %s64 = sadd.s32 %s63, 1
      %s65 = scalar_select %p62, %s63, %s64
      %p68 = pneg %p62
      %p69 = scmp.eq.s32.totalorder %s27, 5
      %p70 = por %p68, %p69
      %p71 = scmp.ne.s32.totalorder %s63, %s66
      %p72 = scmp.eq.s32.totalorder %s27, 0
      %p73 = por %p71, %p72
      %p74 = scmp.ne.s32.totalorder %s63, %s66
      %p75 = scmp.eq.s32.totalorder %s32, 5
      %p76 = por %p74, %p75
      %p77 = scmp.ne.s32.totalorder %s66, %s67
      %p78 = scmp.eq.s32.totalorder %s32, 0
      %p79 = por %p77, %p78
      %p80 = scmp.ne.s32.totalorder %s66, %s67
      %p81 = scmp.eq.s32.totalorder %s33, 5
      %p82 = por %p80, %p81
      %p84 = scmp.ne.s32.totalorder %s67, %s83
      %p85 = scmp.eq.s32.totalorder %s33, 0
      %p86 = por %p84, %p85
      %s87 = ssub.s32 %s27, %s34
      %p88 = scmp.eq.s32.totalorder %s87, 0
      %s90 = sadd.s32 %s89, 1
      %s91 = scalar_select %p88, %s89, %s90
      %p94 = pneg %p88
      %p95 = scmp.eq.s32.totalorder %s27, 5
      %p96 = por %p94, %p95
      %p97 = scmp.ne.s32.totalorder %s89, %s92
      %p98 = scmp.eq.s32.totalorder %s27, 0
      %p99 = por %p97, %p98
      %p100 = scmp.ne.s32.totalorder %s89, %s92
      %p101 = scmp.eq.s32.totalorder %s32, 5
      %p102 = por %p100, %p101
      %p103 = scmp.ne.s32.totalorder %s92, %s93
      %p104 = scmp.eq.s32.totalorder %s32, 0
      %p105 = por %p103, %p104
      %p106 = scmp.ne.s32.totalorder %s92, %s93
      %p107 = scmp.eq.s32.totalorder %s33, 5
      %p108 = por %p106, %p107
      %p110 = scmp.ne.s32.totalorder %s93, %s109
      %p111 = scmp.eq.s32.totalorder %s33, 0
      %p112 = por %p110, %p111
      %p113 = scmp.le.s32.totalorder 1, %s27
      %p114 = scmp.lt.s32.totalorder %s27, 7
      %p115 = pnand %p113, %p114
      %p116 = pneg %p115
      // Predicated region
      $region9: #{tpu_custom_call.1} parent=5 // pred_check
        _
      $region10: #{tpu_custom_call.1} parent=5 // pred_check_branch
        %118 = sbr.rel (%p115) target = $region12
      $region11: #{tpu_custom_call.1} parent=5 // pred_region
        %s119 = ssub.s32 %s27, 1
      $region12: #{tpu_custom_call.1} parent=5 // pred_fallthru
        _
      %p120 = scmp.lt.s32.totalorder %s27, 6
      // Predicated region
      $region13: #{tpu_custom_call.1} parent=5 // pred_check
        %p121 = pneg %p120
      $region14: #{tpu_custom_call.1} parent=5 // pred_check_branch
        %123 = sbr.rel (%p121) target = $region16
      $region15: #{tpu_custom_call.1} parent=5 // pred_region
        // Predicated region
        $region17: #{tpu_custom_call.1} parent=15 // pred_check
          %p124 = pneg %p47
        $region18: #{tpu_custom_call.1} parent=15 // pred_check_branch
          %126 = sbr.rel (%p124) target = $region20
        $region19: #{tpu_custom_call.1} parent=15 // pred_region
          %s127 = sand.u32 %s37, 1
          %s128 = scalar_lea.sflag [#allocation6], %s127
          %s129 = sand.u32 %s37, 1
          %s130 = smul.addr %s129, 32
          %s131 = scalar_lea.vmem [#allocation5], %s130
          %s133 = ssub.s32 512, 512
          %134 = vsyncadd %s128, %s133
          %s135 = smul.addr %s27, 4
          %s136 = smul.addr %s135, 128
          %s137 = scalar_lea.hbm %s2, %s136
          %s139 = sshll.u32 %s131, 4
          %s140 = int_to_ptr.vmem [resolvable:$true] %s139
          %142 = dma.hbm_to_vmem [thread:$0]  %s137, 512, %s140, %s128
        $region20: #{tpu_custom_call.1} parent=15 // pred_fallthru
          _
        // Predicated region
        $region21: #{tpu_custom_call.1} parent=15 // pred_check
          %p143 = pneg %p73
        $region22: #{tpu_custom_call.1} parent=15 // pred_check_branch
          %145 = sbr.rel (%p143) target = $region24
        $region23: #{tpu_custom_call.1} parent=15 // pred_region
          %s146 = sand.u32 %s63, 1
          %s147 = scalar_lea.sflag [#allocation9], %s146
          %s148 = sand.u32 %s63, 1
          %s149 = smul.addr %s148, 32
          %s150 = scalar_lea.vmem [#allocation8], %s149
          %s152 = ssub.s32 512, 512
          %153 = vsyncadd %s147, %s152
          %s154 = smul.addr %s27, 4
          %s155 = smul.addr %s154, 128
          %s156 = scalar_lea.hbm %s3, %s155
          %s158 = sshll.u32 %s150, 4
          %s159 = int_to_ptr.vmem [resolvable:$true] %s158
          %161 = dma.hbm_to_vmem [thread:$0]  %s156, 512, %s159, %s147
        $region24: #{tpu_custom_call.1} parent=15 // pred_fallthru
          _
      $region16: #{tpu_custom_call.1} parent=5 // pred_fallthru
        _
      %p162 = scmp.le.s32.totalorder 1, %s27
      %p163 = scmp.lt.s32.totalorder %s27, 7
      %p164 = pnand %p162, %p163
      %p165 = pneg %p164
      // Predicated region
      $region25: #{tpu_custom_call.1} parent=5 // pred_check
        _
      $region26: #{tpu_custom_call.1} parent=5 // pred_check_branch
        %167 = sbr.rel (%p164) target = $region28
      $region27: #{tpu_custom_call.1} parent=5 // pred_region
        %s168 = ssub.s32 %s27, 1
        %s169 = sand.u32 %s40, 1
        %s170 = scalar_lea.sflag [#allocation6], %s169
        %s171 = sand.u32 %s40, 1
        %s172 = smul.addr %s171, 32
        %s173 = scalar_lea.vmem [#allocation5], %s172
        // Predicated region
        $region29: #{tpu_custom_call.1} parent=27 // pred_check
          %p174 = pneg %p53
        $region30: #{tpu_custom_call.1} parent=27 // pred_check_branch
          %176 = sbr.rel (%p174) target = $region32
        $region31: #{tpu_custom_call.1} parent=27 // pred_region
          %177 = dma.done %s170, 512
        $region32: #{tpu_custom_call.1} parent=27 // pred_fallthru
          _
        %s178 = sand.u32 %s66, 1
        %s179 = scalar_lea.sflag [#allocation9], %s178
        %s180 = sand.u32 %s66, 1
        %s181 = smul.addr %s180, 32
        %s182 = scalar_lea.vmem [#allocation8], %s181
        // Predicated region
        $region33: #{tpu_custom_call.1} parent=27 // pred_check
          %p183 = pneg %p79
        $region34: #{tpu_custom_call.1} parent=27 // pred_check_branch
          %185 = sbr.rel (%p183) target = $region36
        $region35: #{tpu_custom_call.1} parent=27 // pred_region
          %186 = dma.done %s179, 512
        $region36: #{tpu_custom_call.1} parent=27 // pred_fallthru
          _
        %s187 = sand.u32 %s40, 1
        %s188 = scalar_lea.sflag [#allocation6], %s187
        %s189 = sand.u32 %s40, 1
        %s190 = smul.addr %s189, 32
        %s191 = scalar_lea.vmem [#allocation5], %s190
        %p192 = pneg %p53
        %p193 = pneg %p50
        %s194 = sand.u32 %s66, 1
        %s195 = scalar_lea.sflag [#allocation9], %s194
        %s196 = sand.u32 %s66, 1
        %s197 = smul.addr %s196, 32
        %s198 = scalar_lea.vmem [#allocation8], %s197
        %p199 = pneg %p79
        %p200 = pneg %p76
        %p201 = pneg %p105
        %p202 = pneg %p102
        %s203 = sand.u32 %s92, 1
        %s204 = scalar_lea.sflag [#allocation7], %s203
        %s205 = sand.u32 %s92, 1
        %s206 = smul.addr %s205, 8
        %s207 = scalar_lea.vmem [#allocation10], %s206
        %s208 = sld [smem:[#allocation3 + %s32]]
        %s209 = scvt.s32.f32 %s208
        %s210 = sld [smem:[#allocation4 + %s32]]
        %v211 = vld [vmem:[%s173] sm:$0xff]
        %v212 = vld [vmem:[%s173 + $0x8] sm:$0xff]
        %v213 = vld [vmem:[%s173 + $0x10] sm:$0xff]
        %v214 = vld [vmem:[%s173 + $0x18] sm:$0xff]
        %v215 = vld [vmem:[%s182] sm:$0xff]
        %v216 = vld [vmem:[%s182 + $0x8] sm:$0xff]
        %v217 = vld [vmem:[%s182 + $0x10] sm:$0xff]
        %v218 = vld [vmem:[%s182 + $0x18] sm:$0xff]
        %p219 = scmp.eq.s32.totalorder %s210, 0
        // Predicated region
        $region37: #{tpu_custom_call.1} parent=27 // pred_check
          %p220 = pneg %p219
        $region38: #{tpu_custom_call.1} parent=27 // pred_check_branch
          %222 = sbr.rel (%p220) target = $region40
        $region39: #{tpu_custom_call.1} parent=27 // pred_region
          %v223 = vmax.f32 %v211, 0.0
          %v224 = vmax.f32 %v212, 0.0
          %v225 = vmax.f32 %v213, 0.0
          %v226 = vmax.f32 %v214, 0.0
          %v227 = vmul.f32 %v211, %v215
          %v228 = vmul.f32 %v212, %v216
          %v229 = vmul.f32 %v213, %v217
          %v230 = vmul.f32 %v214, %v218
          %v231 = vsub.f32 %v223, %v227
          %v232 = vsub.f32 %v224, %v228
          %v233 = vsub.f32 %v225, %v229
          %v234 = vsub.f32 %v226, %v230
          %v235 = vand.u32 2147483647, %v211
          %v236 = vand.u32 2147483647, %v212
          %v237 = vand.u32 2147483647, %v213
          %v238 = vand.u32 2147483647, %v214
          %v239 = vsub.f32 0.0, %v235
          %v240 = vsub.f32 0.0, %v236
          %v241 = vsub.f32 0.0, %v237
          %v242 = vsub.f32 0.0, %v238
          %v243 = vmul.f32 %v239, 1.442695
          %v244 = vpow.pop %v243
          %v245 = vmul.f32 %v240, 1.442695
          %v246 = vpow.pop %v245
          %v247 = vmul.f32 %v241, 1.442695
          %v248 = vpow.pop %v247
          %v249 = vmul.f32 %v242, 1.442695
          %v250 = vpow.pop %v249
          %v251 = vadd.f32 %v244, 1.0
          %v252 = vlog2.pop %v251
          %v253 = vmul.f32 %v252, 0.6931472
          %v254 = vmul.f32 -0.5, %v244
          %v255 = vadd.f32 %v254, 1.0
          %v256 = vmul.f32 %v255, %v244
          %v257 = vand.u32 2147483647, %v244
          %vm258 = vcmp.lt.f32.partialorder %v257, 0.0004427343
          %v259 = vsel %vm258, %v256, %v253
          %v260 = vadd.f32 %v246, 1.0
          %v261 = vlog2.pop %v260
          %v262 = vmul.f32 %v261, 0.6931472
          %v263 = vmul.f32 -0.5, %v246
          %v264 = vadd.f32 %v263, 1.0
          %v265 = vmul.f32 %v264, %v246
          %v266 = vand.u32 2147483647, %v246
          %vm267 = vcmp.lt.f32.partialorder %v266, 0.0004427343
          %v268 = vsel %vm267, %v265, %v262
          %v269 = vadd.f32 %v248, 1.0
          %v270 = vlog2.pop %v269
          %v271 = vmul.f32 %v270, 0.6931472
          %v272 = vmul.f32 -0.5, %v248
          %v273 = vadd.f32 %v272, 1.0
          %v274 = vmul.f32 %v273, %v248
          %v275 = vand.u32 2147483647, %v248
          %vm276 = vcmp.lt.f32.partialorder %v275, 0.0004427343
          %v277 = vsel %vm276, %v274, %v271
          %v278 = vadd.f32 %v250, 1.0
          %v279 = vlog2.pop %v278
          %v280 = vmul.f32 %v279, 0.6931472
          %v281 = vmul.f32 -0.5, %v250
          %v282 = vadd.f32 %v281, 1.0
          %v283 = vmul.f32 %v282, %v250
          %v284 = vand.u32 2147483647, %v250
          %vm285 = vcmp.lt.f32.partialorder %v284, 0.0004427343
          %v286 = vsel %vm285, %v283, %v280
          %v287 = vadd.f32 %v231, %v259
          %v288 = vadd.f32 %v232, %v268
          %v289 = vadd.f32 %v233, %v277
          %v290 = vadd.f32 %v234, %v286
          %v291 = vadd.f32 %v287, %v288
          %v292 = vadd.f32 %v291, %v289
          %v293 = vadd.f32 %v292, %v290
          %v294 = vstv %s209
          %v295 = vrcp.pop %v294
          %v296 = vmul.f32 %v293, %v295
          %297 = vst [vmem:[%s207] sm:$0xff] %v296
        $region40: #{tpu_custom_call.1} parent=27 // pred_fallthru
          _
        %p298 = scmp.ne.s32.totalorder %s210, 0
        // Predicated region
        $region41: #{tpu_custom_call.1} parent=27 // pred_check
          %p299 = pneg %p298
        $region42: #{tpu_custom_call.1} parent=27 // pred_check_branch
          %301 = sbr.rel (%p299) target = $region44
        $region43: #{tpu_custom_call.1} parent=27 // pred_region
          %v302 = vsub.f32 %v211, %v215
          %v303 = vsub.f32 %v212, %v216
          %v304 = vsub.f32 %v213, %v217
          %v305 = vsub.f32 %v214, %v218
          %v306 = vand.u32 2147483647, %v302
          %v307 = vand.u32 2147483647, %v303
          %v308 = vand.u32 2147483647, %v304
          %v309 = vand.u32 2147483647, %v305
          %vm310 = vcmp.lt.f32.partialorder %v306, 1.0
          %vm311 = vcmp.lt.f32.partialorder %v307, 1.0
          %vm312 = vcmp.lt.f32.partialorder %v308, 1.0
          %vm313 = vcmp.lt.f32.partialorder %v309, 1.0
          %v314 = vmul.f32 %v302, 0.5
          %v315 = vmul.f32 %v303, 0.5
          %v316 = vmul.f32 %v304, 0.5
          %v317 = vmul.f32 %v305, 0.5
          %v318 = vmul.f32 %v314, %v302
          %v319 = vmul.f32 %v315, %v303
          %v320 = vmul.f32 %v316, %v304
          %v321 = vmul.f32 %v317, %v305
          %v322 = vsub.f32 %v306, 0.5
          %v323 = vsub.f32 %v307, 0.5
          %v324 = vsub.f32 %v308, 0.5
          %v325 = vsub.f32 %v309, 0.5
          %v326 = vsel %vm310, %v318, %v322
          %v327 = vsel %vm311, %v319, %v323
          %v328 = vsel %vm312, %v320, %v324
          %v329 = vsel %vm313, %v321, %v325
          %v330 = vadd.f32 %v326, %v327
          %v331 = vadd.f32 %v330, %v328
          %v332 = vadd.f32 %v331, %v329
          %v333 = vstv %s209
          %v334 = vrcp.pop %v333
          %v335 = vmul.f32 %v332, %v334
          %336 = vst [vmem:[%s207] sm:$0xff] %v335
        $region44: #{tpu_custom_call.1} parent=27 // pred_fallthru
          _
        %s337 = sand.u32 %s92, 1
        %s338 = scalar_lea.sflag [#allocation7], %s337
        %s339 = sand.u32 %s92, 1
        %s340 = smul.addr %s339, 8
        %s341 = scalar_lea.vmem [#allocation10], %s340
        // Predicated region
        $region45: #{tpu_custom_call.1} parent=27 // pred_check
          %p342 = pneg %p102
        $region46: #{tpu_custom_call.1} parent=27 // pred_check_branch
          %344 = sbr.rel (%p342) target = $region48
        $region47: #{tpu_custom_call.1} parent=27 // pred_region
          %s346 = ssub.s32 128, 128
          %347 = vsyncadd %s338, %s346
          %s348 = smul.addr %s32, 128
          %s349 = scalar_lea.hbm %s4, %s348
          %s351 = sshll.u32 %s341, 4
          %s352 = int_to_ptr.vmem [resolvable:$true] %s351
          %354 = dma.vmem_to_hbm [thread:$0]  %s352, 128, %s349, %s338
        $region48: #{tpu_custom_call.1} parent=27 // pred_fallthru
          _
      $region28: #{tpu_custom_call.1} parent=5 // pred_fallthru
        _
      %p355 = scmp.le.s32.totalorder 2, %s27
      // Predicated region
      $region49: #{tpu_custom_call.1} parent=5 // pred_check
        %p356 = pneg %p355
      $region50: #{tpu_custom_call.1} parent=5 // pred_check_branch
        %358 = sbr.rel (%p356) target = $region52
      $region51: #{tpu_custom_call.1} parent=5 // pred_region
        %s359 = ssub.s32 %s27, 2
        // Predicated region
        $region53: #{tpu_custom_call.1} parent=51 // pred_check
          %p360 = pneg %p108
        $region54: #{tpu_custom_call.1} parent=51 // pred_check_branch
          %362 = sbr.rel (%p360) target = $region56
        $region55: #{tpu_custom_call.1} parent=51 // pred_region
          %s363 = sand.u32 %s93, 1
          %s364 = scalar_lea.sflag [#allocation7], %s363
          %s365 = sand.u32 %s93, 1
          %s366 = smul.addr %s365, 8
          %s367 = scalar_lea.vmem [#allocation10], %s366
          %368 = dma.done %s364, 128
        $region56: #{tpu_custom_call.1} parent=51 // pred_fallthru
          _
      $region52: #{tpu_custom_call.1} parent=5 // pred_fallthru
        _
    $region6: #{tpu_custom_call.1} parent=1 // loop_footer
      %s31 = sadd.s32 1, %s27
    $region7: #{tpu_custom_call.1} parent=1 // loop_footer_branch
      %26 = sbr.rel target = $region3
    $region8: #{tpu_custom_call.1} parent=1 // loop_exit
      _
    %369 = vsyncpa [#allocation6], 1
    %s370 = scalar_lea.sflag [#allocation6], 1
    %371 = vsyncpa %s370, 1
    %372 = vsyncpa [#allocation9], 1
    %s373 = scalar_lea.sflag [#allocation9], 1
    %374 = vsyncpa %s373, 1
    %375 = vsyncpa [#allocation7], 1
    %s376 = scalar_lea.sflag [#allocation7], 1
    %377 = vsyncpa %s376, 1

</llo_original>
